<compile_context>
chip_gen: v5e
topology: v5e:2x2
jax: 0.10.0
libtpu: 0.0.40
codegen_flags: <defaults>
</compile_context>

<pallas_src>
from functools import partial

import jax
import jax.numpy as jnp
from jax.experimental import pallas as pl
from jax.experimental.pallas import tpu as pltpu


# hidden column blocks (order of the fused 3x3 conv outputs)
_HEAD_ORDER = ('gap_hm', 'gap_off', 'piece_hm', 'piece_off')
# fused output rows (heatmaps first so sigmoid hits a contiguous sublane slice)
_ROW_LAYOUT = (('gap_hm', 0), ('piece_hm', 0),
               ('gap_off', 0), ('gap_off', 1),
               ('piece_off', 0), ('piece_off', 1))


def _heads_kernel(x_ref, w3_ref, b3_ref, w1_ref, b1_ref, out_ref):
    # x_ref : (1, TH+2, W+2, C) bf16  zero-padded row tile (2-row halo)
    # w3_ref: (9*C, 4*C)        bf16  fused 3x3 conv weights (4 heads side by side)
    # b3_ref: (1, 4*C)          f32   fused 3x3 conv biases
    # w1_ref: (4*C, 8)          bf16  fused block-diagonal 1x1 weights
    #         out cols: 0=gap_hm, 1=piece_hm, 2:4=gap_off, 4:6=piece_off, 6:8=pad
    # b1_ref: (1, 8)            f32   fused 1x1 biases
    # out_ref: (1, 8, TH*W)     f32   lane-dense fused output tile
    TH = x_ref.shape[1] - 2
    W = x_ref.shape[2] - 2
    C = x_ref.shape[3]
    M = TH * W

    xp = x_ref[0]  # (TH+2, W+2, C)

    # im2col for this row tile; column blocks ordered (ky, kx, cin), matching
    # the fused 3x3 weight layout.
    patches = jnp.concatenate(
        [xp[dy:dy + TH, dx:dx + W, :].reshape(M, C)
         for dy in range(3) for dx in range(3)],
        axis=1)                                                   # (M, 9C) bf16

    # All four 3x3 convs in one MXU matmul (f32 accumulate), bias + ReLU in f32.
    hidden = jnp.dot(patches, w3_ref[...],
                     preferred_element_type=jnp.float32) + b3_ref[...]
    hidden = jnp.maximum(hidden, 0.0).astype(jnp.bfloat16)       # (M, 4C)

    # Fused 1x1 heads: (M,4C)@(4C,8).  Transpose only the small (M,8) result
    # to the lane-dense (8, M) output layout (never the big hidden tile).
    out_mt = jnp.dot(hidden, w1_ref[...],
                     preferred_element_type=jnp.float32) + b1_ref[...]  # (M, 8)
    out_t = out_mt.T                                              # (8, M)

    # Heatmap rows are contiguous (0:2): sigmoid only there, rest stored as-is.
    out_ref[0, 0:2, :] = jax.nn.sigmoid(out_t[0:2, :]).astype(out_ref.dtype)
    out_ref[0, 2:8, :] = out_t[2:8, :].astype(out_ref.dtype)


def init_params(key, in_channels):
    """Deterministic init mirroring CenterNetHeads._init_weights.

    Layouts: 3x3 conv weight -> (3, 3, Cin, Cout) [HWIO]; 1x1 -> (Cin, Cout);
    biases kept 2D (1, Cout).
    """
    C = in_channels
    std3 = (2.0 / (9.0 * C)) ** 0.5  # kaiming_normal_, mode='fan_out', relu
    k = jax.random.split(key, 4)

    def conv3(kk):
        return jax.random.normal(kk, (3, 3, C, C), jnp.float32) * std3

    zeros_c = jnp.zeros((1, C), jnp.float32)
    return {
        # heatmap heads: final 1x1 conv weight = 0, bias = -2.19
        'gap_hm': (conv3(k[0]), zeros_c,
                   jnp.zeros((C, 1), jnp.float32),
                   jnp.full((1, 1), -2.19, jnp.float32)),
        'piece_hm': (conv3(k[1]), zeros_c,
                     jnp.zeros((C, 1), jnp.float32),
                     jnp.full((1, 1), -2.19, jnp.float32)),
        # offset heads: final 1x1 conv weight ~ N(0, 0.001), bias = 0
        'gap_off': (conv3(k[2]), zeros_c,
                    jax.random.normal(jax.random.fold_in(k[2], 7), (C, 2),
                                      jnp.float32) * 0.001,
                    jnp.zeros((1, 2), jnp.float32)),
        'piece_off': (conv3(k[3]), zeros_c,
                      jax.random.normal(jax.random.fold_in(k[3], 7), (C, 2),
                                        jnp.float32) * 0.001,
                      jnp.zeros((1, 2), jnp.float32)),
    }


def _random_params(key, C):
    """Non-degenerate random params (exercise all output rows in the test)."""
    out_ch = {'gap_hm': 1, 'gap_off': 2, 'piece_hm': 1, 'piece_off': 2}
    params = {}
    for i, (name, oc) in enumerate(out_ch.items()):
        k1, k2, k3, k4 = jax.random.split(jax.random.fold_in(key, i), 4)
        params[name] = (
            jax.random.normal(k1, (3, 3, C, C), jnp.float32) * 0.08,
            jax.random.normal(k2, (1, C), jnp.float32) * 0.1,
            jax.random.normal(k3, (C, oc), jnp.float32) * 0.1,
            jax.random.normal(k4, (1, oc), jnp.float32) * 0.1,
        )
    return params


def _fuse_params(params, C):
    """Stack the four heads into fused kernel operands (weights cast to bf16)."""
    # Fused 3x3 weights (9C, 4C): column block i = head i's conv.
    w3f = jnp.concatenate(
        [params[n][0].reshape(9 * C, C) for n in _HEAD_ORDER], axis=1)
    b3f = jnp.concatenate([params[n][1] for n in _HEAD_ORDER], axis=1)  # (1, 4C)

    # Fused block-diagonal 1x1 weights (4C, 8); columns follow _ROW_LAYOUT.
    blk = {n: i for i, n in enumerate(_HEAD_ORDER)}
    w1f = jnp.zeros((4 * C, 8), jnp.float32)
    b1f = jnp.zeros((1, 8), jnp.float32)
    for r, (n, oc) in enumerate(_ROW_LAYOUT):
        i = blk[n]
        w1, b1 = params[n][2], params[n][3]
        w1f = w1f.at[i * C:(i + 1) * C, r].set(w1[:, oc])
        b1f = b1f.at[0, r].set(b1[0, oc])
    return (w3f.astype(jnp.bfloat16), b3f.astype(jnp.float32),
            w1f.astype(jnp.bfloat16), b1f.astype(jnp.float32))


def _choose_tile_rows(H, W, max_m_tile):
    """Largest TH dividing H with TH*W lane-aligned (mult. of 128) and <= max_m_tile."""
    cands = [th for th in range(1, H + 1)
             if H % th == 0 and (th * W) % 128 == 0]
    fitting = [th for th in cands if th * W <= max_m_tile]
    if fitting:
        return max(fitting)
    if cands:
        return min(cands)   # huge images: smallest lane-aligned tile
    return H                # tiny / odd shapes: single tile


@partial(jax.jit, static_argnames=("max_m_tile",))
def centernet_heads_forward(x_nchw, params, *, max_m_tile=4096):
    B, C, H, W = x_nchw.shape
    M = H * W
    TH = _choose_tile_rows(H, W, max_m_tile)
    nT = H // TH
    MT = TH * W

    # NCHW -> NHWC (bf16) + zero pad + overlapping row tiles with 2-row halo.
    # XLA fuses cast + transpose + pad + tile-gather into one HBM pass.
    x = jnp.transpose(x_nchw.astype(jnp.bfloat16), (0, 2, 3, 1))
    x_pad = jnp.pad(x, ((0, 0), (1, 1), (1, 1), (0, 0)))
    x_tiled = jnp.stack(
        [x_pad[:, t * TH:t * TH + TH + 2] for t in range(nT)],
        axis=1).reshape(B * nT, TH + 2, W + 2, C)

    w3f, b3f, w1f, b1f = _fuse_params(params, C)

    # Per-tile VMEM budget (double-buffered in/out + weights + temps), 2x slack.
    est = (2 * (TH + 2) * (W + 2) * C * 2                       # input tiles bf16
           + 2 * 8 * MT * 4                                     # output tiles f32
           + 2 * (9 * C * 4 * C * 2 + 4 * C * 4 + 4 * C * 8 * 2 + 8 * 4)
           + MT * 9 * C * 2                                     # im2col patches bf16
           + MT * 4 * C * (4 + 2)                               # hidden f32 + bf16
           + MT * 8 * 4 * 3)                                    # (M,8)/(8,M) temps
    vmem_limit = int(min(max(2 * est, 32 << 20), 60 << 20))

    cost = pl.CostEstimate(
        flops=2 * B * M * (9 * C) * (4 * C) + 2 * B * M * (4 * C) * 8,
        transcendentals=2 * B * M,
        bytes_accessed=(x_tiled.size * 2 + w3f.size * 2 + w1f.size * 2
                        + b3f.size * 4 + b1f.size * 4 + B * 8 * M * 4))

    out = pl.pallas_call(
        _heads_kernel,
        out_shape=jax.ShapeDtypeStruct((B, 8, M), jnp.float32),
        grid_spec=pltpu.PrefetchScalarGridSpec(
            num_scalar_prefetch=0,
            grid=(B, nT),
            in_specs=[
                pl.BlockSpec((1, TH + 2, W + 2, C),
                             lambda b, t: (b * nT + t, 0, 0, 0)),
                pl.BlockSpec((9 * C, 4 * C), lambda b, t: (0, 0)),
                pl.BlockSpec((1, 4 * C), lambda b, t: (0, 0)),
                pl.BlockSpec((4 * C, 8), lambda b, t: (0, 0)),
                pl.BlockSpec((1, 8), lambda b, t: (0, 0)),
            ],
            out_specs=pl.BlockSpec((1, 8, MT), lambda b, t: (b, 0, t)),
        ),
        compiler_params=pltpu.CompilerParams(
            dimension_semantics=("parallel", "parallel"),
            vmem_limit_bytes=vmem_limit),
        cost_estimate=cost,
    )(x_tiled, w3f, b3f, w1f, b1f)

    out = out.reshape(B, 8, H, W)   # rows are channel-first already == NCHW
    return {
        'gap_heatmap': out[:, 0:1],
        'piece_heatmap': out[:, 1:2],
        'gap_offset': out[:, 2:4],
        'piece_offset': out[:, 4:6],
    }


def ref_forward(x_nchw, params):
    """Pure-JAX f32 reference (XLA conv) for correctness checking."""
    x = jnp.transpose(x_nchw, (0, 2, 3, 1)).astype(jnp.float32)

    def head(p, sigmoid):
        w3, b3, w1, b1 = p
        y = jax.lax.conv_general_dilated(
            x, w3, window_strides=(1, 1), padding='SAME',
            dimension_numbers=('NHWC', 'HWIO', 'NHWC')) + b3.reshape(1, 1, 1, -1)
        y = jnp.maximum(y, 0.0)
        z = jnp.einsum('bhwc,co->bhwo', y, w1) + b1.reshape(1, 1, 1, -1)
        if sigmoid:
            z = jax.nn.sigmoid(z)
        return jnp.transpose(z, (0, 3, 1, 2))

    return {
        'gap_heatmap': head(params['gap_hm'], True),
        'gap_offset': head(params['gap_off'], False),
        'piece_heatmap': head(params['piece_hm'], True),
        'piece_offset': head(params['piece_off'], False),
    }


if __name__ == "__main__":
    # Small shapes consistent with the module's [B, C, H, W] contract.
    # max_m_tile=128 forces TH=8 / nT=2, exercising the halo row-tiling path.
    B, C, H, W = 2, 32, 16, 16
    key = jax.random.PRNGKey(0)
    kx, kp = jax.random.split(key)
    x = jax.random.normal(kx, (B, C, H, W), jnp.float32)

    expected_shapes = {
        'gap_heatmap': (B, 1, H, W), 'gap_offset': (B, 2, H, W),
        'piece_heatmap': (B, 1, H, W), 'piece_offset': (B, 2, H, W),
    }

    for tag, params in (("module_init", init_params(kp, C)),
                        ("random", _random_params(jax.random.fold_in(kp, 1), C))):
        out = centernet_heads_forward(x, params, max_m_tile=128)
        out = jax.block_until_ready(out)
        ref = ref_forward(x, params)
        for name, shape in expected_shapes.items():
            assert out[name].shape == shape, (tag, name, out[name].shape, shape)
            # bf16 matmul operands with f32 accumulation -> loosened tolerance.
            assert jnp.allclose(out[name], ref[name], atol=2e-2, rtol=2e-2), (tag, name)

    print("KERNEL_OK")
</pallas_src>

<mosaic_0001>
module attributes {stable_mosaic.version = 11 : i64} {
  func.func @_heads_kernel(%arg0: i32, %arg1: i32, %arg2: memref<1x10x18x32xbf16, #tpu.memory_space<vmem>>, %arg3: memref<288x128xbf16, #tpu.memory_space<vmem>>, %arg4: memref<1x128xf32, #tpu.memory_space<vmem>>, %arg5: memref<128x8xbf16, #tpu.memory_space<vmem>>, %arg6: memref<1x8xf32, #tpu.memory_space<vmem>>, %arg7: memref<1x8x128xf32, #tpu.memory_space<vmem>>) attributes {dimension_semantics = [#tpu.dimension_semantics<parallel>, #tpu.dimension_semantics<parallel>], iteration_bounds = array<i64: 2, 2>, scalar_prefetch = 0 : i64, scratch_operands = 0 : i64, tpu.core_type = #tpu.core_type<tc>, window_params = [{transform_indices = @transform_0, window_bounds = array<i64: 1, 10, 18, 32>}, {pipeline_mode = #tpu.pipeline_mode<synchronous>, transform_indices = @transform_1, window_bounds = array<i64: 288, 128>}, {pipeline_mode = #tpu.pipeline_mode<synchronous>, transform_indices = @transform_2, window_bounds = array<i64: 1, 128>}, {pipeline_mode = #tpu.pipeline_mode<synchronous>, transform_indices = @transform_3, window_bounds = array<i64: 128, 8>}, {pipeline_mode = #tpu.pipeline_mode<synchronous>, transform_indices = @transform_4, window_bounds = array<i64: 1, 8>}, {transform_indices = @transform_5, window_bounds = array<i64: 1, 8, 128>}]} {
    %c0 = arith.constant 0 : index
    %c0_0 = arith.constant 0 : index
    %c0_1 = arith.constant 0 : index
    %c0_2 = arith.constant 0 : index
    %0 = vector.load %arg2[%c0, %c0_0, %c0_1, %c0_2] : memref<1x10x18x32xbf16, #tpu.memory_space<vmem>>, vector<1x10x18x32xbf16>
    %1 = vector.shape_cast %0 : vector<1x10x18x32xbf16> to vector<10x18x32xbf16>
    %2 = vector.extract_strided_slice %1 {offsets = [0, 0, 0], sizes = [8, 16, 32], strides = [1, 1, 1]} : vector<10x18x32xbf16> to vector<8x16x32xbf16>
    %3 = vector.shape_cast %2 : vector<8x16x32xbf16> to vector<128x32xbf16>
    %4 = vector.extract_strided_slice %1 {offsets = [0, 1, 0], sizes = [8, 16, 32], strides = [1, 1, 1]} : vector<10x18x32xbf16> to vector<8x16x32xbf16>
    %5 = vector.shape_cast %4 : vector<8x16x32xbf16> to vector<128x32xbf16>
    %6 = vector.extract_strided_slice %1 {offsets = [0, 2, 0], sizes = [8, 16, 32], strides = [1, 1, 1]} : vector<10x18x32xbf16> to vector<8x16x32xbf16>
    %7 = vector.shape_cast %6 : vector<8x16x32xbf16> to vector<128x32xbf16>
    %8 = vector.extract_strided_slice %1 {offsets = [1, 0, 0], sizes = [8, 16, 32], strides = [1, 1, 1]} : vector<10x18x32xbf16> to vector<8x16x32xbf16>
    %9 = vector.shape_cast %8 : vector<8x16x32xbf16> to vector<128x32xbf16>
    %10 = vector.extract_strided_slice %1 {offsets = [1, 1, 0], sizes = [8, 16, 32], strides = [1, 1, 1]} : vector<10x18x32xbf16> to vector<8x16x32xbf16>
    %11 = vector.shape_cast %10 : vector<8x16x32xbf16> to vector<128x32xbf16>
    %12 = vector.extract_strided_slice %1 {offsets = [1, 2, 0], sizes = [8, 16, 32], strides = [1, 1, 1]} : vector<10x18x32xbf16> to vector<8x16x32xbf16>
    %13 = vector.shape_cast %12 : vector<8x16x32xbf16> to vector<128x32xbf16>
    %14 = vector.extract_strided_slice %1 {offsets = [2, 0, 0], sizes = [8, 16, 32], strides = [1, 1, 1]} : vector<10x18x32xbf16> to vector<8x16x32xbf16>
    %15 = vector.shape_cast %14 : vector<8x16x32xbf16> to vector<128x32xbf16>
    %16 = vector.extract_strided_slice %1 {offsets = [2, 1, 0], sizes = [8, 16, 32], strides = [1, 1, 1]} : vector<10x18x32xbf16> to vector<8x16x32xbf16>
    %17 = vector.shape_cast %16 : vector<8x16x32xbf16> to vector<128x32xbf16>
    %18 = vector.extract_strided_slice %1 {offsets = [2, 2, 0], sizes = [8, 16, 32], strides = [1, 1, 1]} : vector<10x18x32xbf16> to vector<8x16x32xbf16>
    %19 = vector.shape_cast %18 : vector<8x16x32xbf16> to vector<128x32xbf16>
    %20 = tpu.concatenate %3, %5, %7, %9, %11, %13, %15, %17, %19 in 1 : vector<128x32xbf16>, vector<128x32xbf16>, vector<128x32xbf16>, vector<128x32xbf16>, vector<128x32xbf16>, vector<128x32xbf16>, vector<128x32xbf16>, vector<128x32xbf16>, vector<128x32xbf16> -> vector<128x288xbf16>
    %c0_3 = arith.constant 0 : index
    %c0_4 = arith.constant 0 : index
    %21 = vector.load %arg3[%c0_3, %c0_4] : memref<288x128xbf16, #tpu.memory_space<vmem>>, vector<288x128xbf16>
    %cst = arith.constant dense<0.000000e+00> : vector<128x128xf32>
    %22 = tpu.matmul %20, %21, %cst {dimension_numbers = #tpu.dot_dimension_numbers<[1], [0], [0], [1], [0, 0, 1, 1], [], []>} : vector<128x288xbf16>, vector<288x128xbf16>, vector<128x128xf32> -> vector<128x128xf32>
    %c0_5 = arith.constant 0 : index
    %c0_6 = arith.constant 0 : index
    %23 = vector.load %arg4[%c0_5, %c0_6] : memref<1x128xf32, #tpu.memory_space<vmem>>, vector<1x128xf32>
    %24 = vector.broadcast %23 : vector<1x128xf32> to vector<128x128xf32>
    %25 = arith.addf %22, %24 : vector<128x128xf32>
    %cst_7 = arith.constant 0.000000e+00 : f32
    %26 = vector.broadcast %cst_7 : f32 to vector<128x128xf32>
    %27 = arith.maximumf %25, %26 : vector<128x128xf32>
    %28 = arith.truncf %27 : vector<128x128xf32> to vector<128x128xbf16>
    %c0_8 = arith.constant 0 : index
    %c0_9 = arith.constant 0 : index
    %29 = vector.load %arg5[%c0_8, %c0_9] : memref<128x8xbf16, #tpu.memory_space<vmem>>, vector<128x8xbf16>
    %cst_10 = arith.constant dense<0.000000e+00> : vector<128x8xf32>
    %30 = tpu.matmul %28, %29, %cst_10 {dimension_numbers = #tpu.dot_dimension_numbers<[1], [0], [0], [1], [0, 0, 1, 1], [], []>} : vector<128x128xbf16>, vector<128x8xbf16>, vector<128x8xf32> -> vector<128x8xf32>
    %c0_11 = arith.constant 0 : index
    %c0_12 = arith.constant 0 : index
    %31 = vector.load %arg6[%c0_11, %c0_12] : memref<1x8xf32, #tpu.memory_space<vmem>>, vector<1x8xf32>
    %32 = vector.broadcast %31 : vector<1x8xf32> to vector<128x8xf32>
    %33 = arith.addf %30, %32 : vector<128x8xf32>
    %34 = tpu.transpose %33, [1, 0] : vector<128x8xf32> -> vector<8x128xf32>
    %35 = vector.extract_strided_slice %34 {offsets = [0, 0], sizes = [2, 128], strides = [1, 1]} : vector<8x128xf32> to vector<2x128xf32>
    %36 = arith.negf %35 : vector<2x128xf32>
    %37 = math.exp %36 : vector<2x128xf32>
    %cst_13 = arith.constant 1.000000e+00 : f32
    %38 = vector.broadcast %cst_13 : f32 to vector<2x128xf32>
    %39 = arith.addf %38, %37 : vector<2x128xf32>
    %40 = arith.divf %38, %39 : vector<2x128xf32>
    %c0_14 = arith.constant 0 : index
    %c0_15 = arith.constant 0 : index
    %c0_16 = arith.constant 0 : index
    %41 = vector.load %arg7[%c0_14, %c0_15, %c0_16] : memref<1x8x128xf32, #tpu.memory_space<vmem>>, vector<1x2x128xf32>
    %42 = vector.shape_cast %41 : vector<1x2x128xf32> to vector<2x128xf32>
    %43 = vector.shape_cast %40 : vector<2x128xf32> to vector<1x2x128xf32>
    tpu.vector_store %arg7[%c0_14, %c0_15, %c0_16], %43 {strides = array<i32>} : memref<1x8x128xf32, #tpu.memory_space<vmem>>, vector<1x2x128xf32>,
    %44 = vector.extract_strided_slice %34 {offsets = [2, 0], sizes = [6, 128], strides = [1, 1]} : vector<8x128xf32> to vector<6x128xf32>
    %c0_17 = arith.constant 0 : index
    %c2 = arith.constant 2 : index
    %c0_18 = arith.constant 0 : index
    %45 = vector.load %arg7[%c0_17, %c2, %c0_18] : memref<1x8x128xf32, #tpu.memory_space<vmem>>, vector<1x6x128xf32>
    %46 = vector.shape_cast %45 : vector<1x6x128xf32> to vector<6x128xf32>
    %47 = vector.shape_cast %44 : vector<6x128xf32> to vector<1x6x128xf32>
    tpu.vector_store %arg7[%c0_17, %c2, %c0_18], %47 {strides = array<i32>} : memref<1x8x128xf32, #tpu.memory_space<vmem>>, vector<1x6x128xf32>,
    return
  }
  func.func @transform_0(%arg0: i32, %arg1: i32) -> (i32, i32, i32, i32) {
    %c2_i32 = arith.constant 2 : i32
    %0 = arith.muli %arg0, %c2_i32 : i32
    %1 = arith.addi %0, %arg1 : i32
    %c0_i32 = arith.constant 0 : i32
    %c0_i32_0 = arith.constant 0 : i32
    %c0_i32_1 = arith.constant 0 : i32
    %c0_i32_2 = arith.constant 0 : i32
    return %1, %c0_i32, %c0_i32_0, %c0_i32_1 : i32, i32, i32, i32
  }
  func.func @transform_1(%arg0: i32, %arg1: i32) -> (i32, i32) {
    %c0_i32 = arith.constant 0 : i32
    %c0_i32_0 = arith.constant 0 : i32
    %c0_i32_1 = arith.constant 0 : i32
    return %c0_i32, %c0_i32_0 : i32, i32
  }
  func.func @transform_2(%arg0: i32, %arg1: i32) -> (i32, i32) {
    %c0_i32 = arith.constant 0 : i32
    %c0_i32_0 = arith.constant 0 : i32
    %c0_i32_1 = arith.constant 0 : i32
    return %c0_i32, %c0_i32_0 : i32, i32
  }
  func.func @transform_3(%arg0: i32, %arg1: i32) -> (i32, i32) {
    %c0_i32 = arith.constant 0 : i32
    %c0_i32_0 = arith.constant 0 : i32
    %c0_i32_1 = arith.constant 0 : i32
    return %c0_i32, %c0_i32_0 : i32, i32
  }
  func.func @transform_4(%arg0: i32, %arg1: i32) -> (i32, i32) {
    %c0_i32 = arith.constant 0 : i32
    %c0_i32_0 = arith.constant 0 : i32
    %c0_i32_1 = arith.constant 0 : i32
    return %c0_i32, %c0_i32_0 : i32, i32
  }
  func.func @transform_5(%arg0: i32, %arg1: i32) -> (i32, i32, i32) {
    %c0_i32 = arith.constant 0 : i32
    %c0_i32_0 = arith.constant 0 : i32
    return %arg0, %c0_i32, %arg1 : i32, i32, i32
  }
}

</mosaic_0001>

<llo_original>
// kernel: centernet_heads_forward.1
$region0: #{centernet_heads_forward.1}
  #allocation0 [shape = 'u32[]', space=smem, size = 0x4, offset = 0x4, fixed_abs, tag = 'smem constant byte address 0x4 - core index']
  #allocation1 [shape = 'u32[72,128]{1,0:T(1,128)}', space=vmem, size = 0x9000, scoped, tag = 'internal scratch']
  %s0 = inlined_call_operand.vmem [shape: bf16[4,10,18,32], index: 0, kind: input, shape index: {}]
  %s1 = inlined_call_operand.vmem [shape: bf16[288,128], index: 1, kind: input, shape index: {}]
  %s2 = inlined_call_operand.vmem [shape: f32[1,128], index: 2, kind: input, shape index: {}]
  %s3 = inlined_call_operand.vmem [shape: bf16[128,8], index: 3, kind: input, shape index: {}]
  %s4 = inlined_call_operand.vmem [shape: f32[1,8], index: 4, kind: input, shape index: {}]
  %s5 = inlined_call_operand.vmem [shape: f32[2,8,256], index: 5, kind: output, shape index: {}]
  %s6 = sld [smem:[#allocation0]]
  $region53: #{centernet_heads_forward.1} parent=0
    _
  %s8 = ssub.s32 1, %s6
  %s9 = scalar_select 0, %s8, %s6
  loop: start=0, step=1, limit=6
  $region2: #{centernet_heads_forward.1} parent=0 // loop_pre_header
    _
  $region3: #{centernet_heads_forward.1} parent=0 // loop_header
    %s11 = sphi 0, %s15
    %p12 = scmp.ge.s32.totalorder %s11, 6
    %s18 = sphi 0, %s30
    %s19 = sphi 0, %s26
    %s20 = sphi 0, %s18
    %s21 = sphi 0, %s19
    %s22 = sphi 0, %s20
    %s23 = sphi 0, %s21
    %s37 = sphi 0, %s39
    %s40 = sphi 0, %s37
    %s41 = sphi 0, %s40
    %s57 = sphi 0, %s41
    %s61 = sphi 0, %s61
    %s63 = sphi 0, %s61
    %s64 = sphi 0, %s63
    %s78 = sphi 0, %s64
    %s82 = sphi 0, %s82
    %s84 = sphi 0, %s82
    %s85 = sphi 0, %s84
    %s99 = sphi 0, %s85
    %s103 = sphi 0, %s103
    %s105 = sphi 0, %s103
    %s106 = sphi 0, %s105
    %s120 = sphi 0, %s106
    %s124 = sphi 0, %s124
    %s126 = sphi 0, %s124
    %s127 = sphi 0, %s126
    %s141 = sphi 0, %s127
    %s149 = sphi 0, %s151
    %s152 = sphi 0, %s149
    %s153 = sphi 0, %s152
    %s169 = sphi 0, %s153
  $region4: #{centernet_heads_forward.1} parent=0 // loop_header_branch
    %14 = sbr.rel (%p12) target = $region8
  $region5: #{centernet_heads_forward.1} parent=0 // loop_body
    %s16 = ssub.s32 %s11, 1
    %s17 = ssub.s32 %s11, 2
    %s24 = sadd.s32 1, %s19
    %p25 = scmp.ge.s32.totalorder %s24, 2
    %s26 = scalar_select %p25, 0, %s24
    %s27 = sadd.s32 1, %s18
    %s28 = scalar_select %p25, %s27, %s18
    %p29 = scmp.ge.s32.totalorder %s28, 2
    %s30 = scalar_select %p29, 0, %s28
    %s31 = smul.u32 %s18, 2
    %s32 = sadd.s32 %s31, %s19
    %s33 = smul.u32 %s30, 2
    %s34 = sadd.s32 %s33, %s26
    %s35 = ssub.s32 %s32, %s34
    %p36 = scmp.eq.s32.totalorder %s35, 0
    %s38 = sadd.s32 %s37, 1
    %s39 = scalar_select %p36, %s37, %s38
    %p42 = pneg %p36
    %p43 = scmp.eq.s32.totalorder %s11, 3
    %p44 = por %p42, %p43
    %p45 = scmp.ne.s32.totalorder %s37, %s40
    %p46 = scmp.eq.s32.totalorder %s11, 0
    %p47 = por %p45, %p46
    %p48 = scmp.ne.s32.totalorder %s37, %s40
    %p49 = scmp.eq.s32.totalorder %s16, 3
    %p50 = por %p48, %p49
    %p51 = scmp.ne.s32.totalorder %s40, %s41
    %p52 = scmp.eq.s32.totalorder %s16, 0
    %p53 = por %p51, %p52
    %p54 = scmp.ne.s32.totalorder %s40, %s41
    %p55 = scmp.eq.s32.totalorder %s17, 3
    %p56 = por %p54, %p55
    %p58 = scmp.ne.s32.totalorder %s41, %s57
    %p59 = scmp.eq.s32.totalorder %s17, 0
    %p60 = por %p58, %p59
    %s62 = sadd.s32 %s61, 1
    %p65 = scmp.eq.s32.totalorder %s11, 3
    %p66 = scmp.ne.s32.totalorder %s61, %s63
    %p67 = scmp.eq.s32.totalorder %s11, 0
    %p68 = por %p66, %p67
    %p69 = scmp.ne.s32.totalorder %s61, %s63
    %p70 = scmp.eq.s32.totalorder %s16, 3
    %p71 = por %p69, %p70
    %p72 = scmp.ne.s32.totalorder %s63, %s64
    %p73 = scmp.eq.s32.totalorder %s16, 0
    %p74 = por %p72, %p73
    %p75 = scmp.ne.s32.totalorder %s63, %s64
    %p76 = scmp.eq.s32.totalorder %s17, 3
    %p77 = por %p75, %p76
    %p79 = scmp.ne.s32.totalorder %s64, %s78
    %p80 = scmp.eq.s32.totalorder %s17, 0
    %p81 = por %p79, %p80
    %s83 = sadd.s32 %s82, 1
    %p86 = scmp.eq.s32.totalorder %s11, 3
    %p87 = scmp.ne.s32.totalorder %s82, %s84
    %p88 = scmp.eq.s32.totalorder %s11, 0
    %p89 = por %p87, %p88
    %p90 = scmp.ne.s32.totalorder %s82, %s84
    %p91 = scmp.eq.s32.totalorder %s16, 3
    %p92 = por %p90, %p91
    %p93 = scmp.ne.s32.totalorder %s84, %s85
    %p94 = scmp.eq.s32.totalorder %s16, 0
    %p95 = por %p93, %p94
    %p96 = scmp.ne.s32.totalorder %s84, %s85
    %p97 = scmp.eq.s32.totalorder %s17, 3
    %p98 = por %p96, %p97
    %p100 = scmp.ne.s32.totalorder %s85, %s99
    %p101 = scmp.eq.s32.totalorder %s17, 0
    %p102 = por %p100, %p101
    %s104 = sadd.s32 %s103, 1
    %p107 = scmp.eq.s32.totalorder %s11, 3
    %p108 = scmp.ne.s32.totalorder %s103, %s105
    %p109 = scmp.eq.s32.totalorder %s11, 0
    %p110 = por %p108, %p109
    %p111 = scmp.ne.s32.totalorder %s103, %s105
    %p112 = scmp.eq.s32.totalorder %s16, 3
    %p113 = por %p111, %p112
    %p114 = scmp.ne.s32.totalorder %s105, %s106
    %p115 = scmp.eq.s32.totalorder %s16, 0
    %p116 = por %p114, %p115
    %p117 = scmp.ne.s32.totalorder %s105, %s106
    %p118 = scmp.eq.s32.totalorder %s17, 3
    %p119 = por %p117, %p118
    %p121 = scmp.ne.s32.totalorder %s106, %s120
    %p122 = scmp.eq.s32.totalorder %s17, 0
    %p123 = por %p121, %p122
    %s125 = sadd.s32 %s124, 1
    %p128 = scmp.eq.s32.totalorder %s11, 3
    %p129 = scmp.ne.s32.totalorder %s124, %s126
    %p130 = scmp.eq.s32.totalorder %s11, 0
    %p131 = por %p129, %p130
    %p132 = scmp.ne.s32.totalorder %s124, %s126
    %p133 = scmp.eq.s32.totalorder %s16, 3
    %p134 = por %p132, %p133
    %p135 = scmp.ne.s32.totalorder %s126, %s127
    %p136 = scmp.eq.s32.totalorder %s16, 0
    %p137 = por %p135, %p136
    %p138 = scmp.ne.s32.totalorder %s126, %s127
    %p139 = scmp.eq.s32.totalorder %s17, 3
    %p140 = por %p138, %p139
    %p142 = scmp.ne.s32.totalorder %s127, %s141
    %p143 = scmp.eq.s32.totalorder %s17, 0
    %p144 = por %p142, %p143
    %s145 = ssub.s32 %s18, %s30
    %s146 = ssub.s32 %s19, %s26
    %s147 = sor.u32 %s145, %s146
    %p148 = scmp.eq.s32.totalorder %s147, 0
    %s150 = sadd.s32 %s149, 1
    %s151 = scalar_select %p148, %s149, %s150
    %p154 = pneg %p148
    %p155 = scmp.eq.s32.totalorder %s11, 3
    %p156 = por %p154, %p155
    %p157 = scmp.ne.s32.totalorder %s149, %s152
    %p158 = scmp.eq.s32.totalorder %s11, 0
    %p159 = por %p157, %p158
    %p160 = scmp.ne.s32.totalorder %s149, %s152
    %p161 = scmp.eq.s32.totalorder %s16, 3
    %p162 = por %p160, %p161
    %p163 = scmp.ne.s32.totalorder %s152, %s153
    %p164 = scmp.eq.s32.totalorder %s16, 0
    %p165 = por %p163, %p164
    %p166 = scmp.ne.s32.totalorder %s152, %s153
    %p167 = scmp.eq.s32.totalorder %s17, 3
    %p168 = por %p166, %p167
    %p170 = scmp.ne.s32.totalorder %s153, %s169
    %p171 = scmp.eq.s32.totalorder %s17, 0
    %p172 = por %p170, %p171
    %p173 = scmp.le.s32.totalorder 1, %s11
    %p174 = scmp.lt.s32.totalorder %s11, 5
    %p175 = pnand %p173, %p174
    %p176 = pneg %p175
    // Predicated region
    $region9: #{centernet_heads_forward.1} parent=5 // pred_check
      _
    $region10: #{centernet_heads_forward.1} parent=5 // pred_check_branch
      %178 = sbr.rel (%p175) target = $region12
    $region11: #{centernet_heads_forward.1} parent=5 // pred_region
      %s179 = ssub.s32 %s11, 1
      // Predicated region
      $region13: #{centernet_heads_forward.1} parent=11 // pred_check
        %p180 = pneg %p74
      $region14: #{centernet_heads_forward.1} parent=11 // pred_check_branch
        %182 = sbr.rel (%p180) target = $region16
      $region15: #{centernet_heads_forward.1} parent=11 // pred_region
        _
      $region16: #{centernet_heads_forward.1} parent=11 // pred_fallthru
        _
      // Predicated region
      $region17: #{centernet_heads_forward.1} parent=11 // pred_check
        %p183 = pneg %p95
      $region18: #{centernet_heads_forward.1} parent=11 // pred_check_branch
        %185 = sbr.rel (%p183) target = $region20
      $region19: #{centernet_heads_forward.1} parent=11 // pred_region
        _
      $region20: #{centernet_heads_forward.1} parent=11 // pred_fallthru
        _
      // Predicated region
      $region21: #{centernet_heads_forward.1} parent=11 // pred_check
        %p186 = pneg %p116
      $region22: #{centernet_heads_forward.1} parent=11 // pred_check_branch
        %188 = sbr.rel (%p186) target = $region24
      $region23: #{centernet_heads_forward.1} parent=11 // pred_region
        _
      $region24: #{centernet_heads_forward.1} parent=11 // pred_fallthru
        _
      // Predicated region
      $region25: #{centernet_heads_forward.1} parent=11 // pred_check
        %p189 = pneg %p137
      $region26: #{centernet_heads_forward.1} parent=11 // pred_check_branch
        %191 = sbr.rel (%p189) target = $region28
      $region27: #{centernet_heads_forward.1} parent=11 // pred_region
        _
      $region28: #{centernet_heads_forward.1} parent=11 // pred_fallthru
        _
    $region12: #{centernet_heads_forward.1} parent=5 // pred_fallthru
      _
    %p192 = scmp.lt.s32.totalorder %s11, 4
    // Predicated region
    $region29: #{centernet_heads_forward.1} parent=5 // pred_check
      %p193 = pneg %p192
    $region30: #{centernet_heads_forward.1} parent=5 // pred_check_branch
      %195 = sbr.rel (%p193) target = $region32
    $region31: #{centernet_heads_forward.1} parent=5 // pred_region
      // Predicated region
      $region33: #{centernet_heads_forward.1} parent=31 // pred_check
        %p196 = pneg %p47
      $region34: #{centernet_heads_forward.1} parent=31 // pred_check_branch
        %198 = sbr.rel (%p196) target = $region36
      $region35: #{centernet_heads_forward.1} parent=31 // pred_region
        %s199 = smul.u32 %s18, 2
        %s200 = sadd.s32 %s199, %s19
        %p201 = scmp.lt.s32.totalorder %s200, 3
        %s202 = scalar_select %p201, %s200, 3
        %s203 = smul.addr %s202, 30
        %s204 = smul.addr %s203, 4
        %s205 = scalar_lea.vmem %s0, %s204
        %s206 = smul.u32 %s18, 2
        %s207 = sadd.s32 %s206, %s19
      $region36: #{centernet_heads_forward.1} parent=31 // pred_fallthru
        _
    $region32: #{centernet_heads_forward.1} parent=5 // pred_fallthru
      _
    %p208 = scmp.le.s32.totalorder 1, %s11
    %p209 = scmp.lt.s32.totalorder %s11, 5
    %p210 = pnand %p208, %p209
    %p211 = pneg %p210
    // Predicated region
    $region37: #{centernet_heads_forward.1} parent=5 // pred_check
      _
    $region38: #{centernet_heads_forward.1} parent=5 // pred_check_branch
      %213 = sbr.rel (%p210) target = $region40
    $region39: #{centernet_heads_forward.1} parent=5 // pred_region
      %s214 = ssub.s32 %s11, 1
      %s215 = smul.u32 %s20, 2
      %s216 = sadd.s32 %s215, %s21
      %p217 = scmp.lt.s32.totalorder %s216, 3
      %s218 = scalar_select %p217, %s216, 3
      %s219 = smul.addr %s218, 30
      %s220 = smul.addr %s219, 4
      %s221 = scalar_lea.vmem %s0, %s220
      %p222 = pneg %p53
      %p223 = pneg %p50
      %p224 = pneg %p74
      %p225 = pneg %p71
      %p226 = pneg %p95
      %p227 = pneg %p92
      %p228 = pneg %p116
      %p229 = pneg %p113
      %p230 = pneg %p137
      %p231 = pneg %p134
      %p232 = pneg %p165
      %p233 = pneg %p162
      %p234 = scmp.lt.s32.totalorder %s20, 1
      %s235 = scalar_select %p234, %s20, 1
      %p236 = scmp.lt.s32.totalorder %s21, 1
      %s237 = scalar_select %p236, %s21, 1
      %s238 = smul.addr %s235, 2
      %s239 = sadd.s32 %s237, %s238
      %s240 = smul.addr %s239, 8
      %s241 = scalar_lea.vmem %s5, %s240
      %s242 = smul.u32 %s20, 2
      %s243 = sadd.s32 %s242, %s21
      %p244 = scmp.lt.s32.totalorder %s243, 3
      %s245 = scalar_select %p244, %s243, 3
      %s246 = smul.addr %s245, 30
      %s247 = smul.addr %s246, 4
      %s248 = scalar_lea.vmem %s0, %s247
      %s249 = smul.u32 %s20, 2
      %s250 = sadd.s32 %s249, %s21
      %p251 = scmp.lt.s32.totalorder %s20, 1
      %s252 = scalar_select %p251, %s20, 1
      %p253 = scmp.lt.s32.totalorder %s21, 1
      %s254 = scalar_select %p253, %s21, 1
      %s255 = smul.addr %s252, 2
      %s256 = sadd.s32 %s254, %s255
      %s257 = smul.addr %s256, 8
      %s258 = scalar_lea.vmem %s5, %s257
      %v260 = vld [vmem:[%s248] sm:$0xf]
      %v261 = vld [vmem:[%s248 + $0x4] sm:$0xf]
      %v262 = vld [vmem:[%s248 + $0x8] sm:$0x1]
      %v263 = vld [vmem:[%s248 + $0xc] sm:$0xf]
      %v264 = vld [vmem:[%s248 + $0x10] sm:$0xf]
      %v265 = vld [vmem:[%s248 + $0x14] sm:$0x1]
      %v266 = vld [vmem:[%s248 + $0x18] sm:$0xf]
      %v267 = vld [vmem:[%s248 + $0x1c] sm:$0xf]
      %v268 = vld [vmem:[%s248 + $0x20] sm:$0x1]
      %v269 = vld [vmem:[%s248 + $0x24] sm:$0xf]
      %v270 = vld [vmem:[%s248 + $0x28] sm:$0xf]
      %v271 = vld [vmem:[%s248 + $0x2c] sm:$0x1]
      %v272 = vld [vmem:[%s248 + $0x30] sm:$0xf]
      %v273 = vld [vmem:[%s248 + $0x34] sm:$0xf]
      %v274 = vld [vmem:[%s248 + $0x38] sm:$0x1]
      %v275 = vld [vmem:[%s248 + $0x3c] sm:$0xf]
      %v276 = vld [vmem:[%s248 + $0x40] sm:$0xf]
      %v277 = vld [vmem:[%s248 + $0x44] sm:$0x1]
      %v278 = vld [vmem:[%s248 + $0x48] sm:$0xf]
      %v279 = vld [vmem:[%s248 + $0x4c] sm:$0xf]
      %v280 = vld [vmem:[%s248 + $0x50] sm:$0x1]
      %v281 = vld [vmem:[%s248 + $0x54] sm:$0xf]
      %v282 = vld [vmem:[%s248 + $0x58] sm:$0xf]
      %v283 = vld [vmem:[%s248 + $0x5c] sm:$0x1]
      %v284 = vld [vmem:[%s248 + $0x60] sm:$0xf]
      %v285 = vld [vmem:[%s248 + $0x64] sm:$0xf]
      %v286 = vld [vmem:[%s248 + $0x68] sm:$0x1]
      %v287 = vld [vmem:[%s248 + $0x6c] sm:$0xf]
      %v288 = vld [vmem:[%s248 + $0x70] sm:$0xf]
      %v289 = vld [vmem:[%s248 + $0x74] sm:$0x1]
      %vm290 = vsmask.f32 3328
      %vm291 = vsmask.f32 7440
      %vm292 = vmor %vm290, %vm291
      %v294 = vshrl.u32 %v260, 16
      %v296 = vrot.slane %v294, 4
      %v297 = vshll.u32 %v260, 16
      %v299 = vrot.slane %v297, 5
      %v300 = vor.u32 %v296, %v299
      %v301 = vrot.slane %v300, 4
      %v303 = vshll.u32 %v261, 16
      %v305 = vrot.slane %v303, 5
      %v306 = vsel %vm292, %v301, %v305
      %v307 = vshrl.u32 %v261, 16
      %v309 = vrot.slane %v307, 4
      %v310 = vor.u32 %v309, %v305
      %v311 = vrot.slane %v310, 4
      %v313 = vshll.u32 %v262, 16
      %v315 = vrot.slane %v313, 5
      %v316 = vsel %vm292, %v311, %v315
      %v318 = vshrl.u32 %v263, 16
      %v320 = vrot.slane %v318, 4
      %v321 = vshll.u32 %v263, 16
      %v323 = vrot.slane %v321, 5
      %v324 = vor.u32 %v320, %v323
      %v325 = vrot.slane %v324, 4
      %v327 = vshll.u32 %v264, 16
      %v329 = vrot.slane %v327, 5
      %v330 = vsel %vm292, %v325, %v329
      %v331 = vshrl.u32 %v264, 16
      %v333 = vrot.slane %v331, 4
      %v334 = vor.u32 %v333, %v329
      %v335 = vrot.slane %v334, 4
      %v337 = vshll.u32 %v265, 16
      %v339 = vrot.slane %v337, 5
      %v340 = vsel %vm292, %v335, %v339
      %v342 = vshrl.u32 %v266, 16
      %v344 = vrot.slane %v342, 4
      %v345 = vshll.u32 %v266, 16
      %v347 = vrot.slane %v345, 5
      %v348 = vor.u32 %v344, %v347
      %v349 = vrot.slane %v348, 4
      %v351 = vshll.u32 %v267, 16
      %v353 = vrot.slane %v351, 5
      %v354 = vsel %vm292, %v349, %v353
      %v355 = vshrl.u32 %v267, 16
      %v357 = vrot.slane %v355, 4
      %v358 = vor.u32 %v357, %v353
      %v359 = vrot.slane %v358, 4
      %v361 = vshll.u32 %v268, 16
      %v363 = vrot.slane %v361, 5
      %v364 = vsel %vm292, %v359, %v363
      %v366 = vshrl.u32 %v269, 16
      %v368 = vrot.slane %v366, 4
      %v369 = vshll.u32 %v269, 16
      %v371 = vrot.slane %v369, 5
      %v372 = vor.u32 %v368, %v371
      %v373 = vrot.slane %v372, 4
      %v375 = vshll.u32 %v270, 16
      %v377 = vrot.slane %v375, 5
      %v378 = vsel %vm292, %v373, %v377
      %v379 = vshrl.u32 %v270, 16
      %v381 = vrot.slane %v379, 4
      %v382 = vor.u32 %v381, %v377
      %v383 = vrot.slane %v382, 4
      %v385 = vshll.u32 %v271, 16
      %v387 = vrot.slane %v385, 5
      %v388 = vsel %vm292, %v383, %v387
      %v390 = vshrl.u32 %v272, 16
      %v392 = vrot.slane %v390, 4
      %v393 = vshll.u32 %v272, 16
      %v395 = vrot.slane %v393, 5
      %v396 = vor.u32 %v392, %v395
      %v397 = vrot.slane %v396, 4
      %v399 = vshll.u32 %v273, 16
      %v401 = vrot.slane %v399, 5
      %v402 = vsel %vm292, %v397, %v401
      %v403 = vshrl.u32 %v273, 16
      %v405 = vrot.slane %v403, 4
      %v406 = vor.u32 %v405, %v401
      %v407 = vrot.slane %v406, 4
      %v409 = vshll.u32 %v274, 16
      %v411 = vrot.slane %v409, 5
      %v412 = vsel %vm292, %v407, %v411
      %v414 = vshrl.u32 %v275, 16
      %v416 = vrot.slane %v414, 4
      %v417 = vshll.u32 %v275, 16
      %v419 = vrot.slane %v417, 5
      %v420 = vor.u32 %v416, %v419
      %v421 = vrot.slane %v420, 4
      %v423 = vshll.u32 %v276, 16
      %v425 = vrot.slane %v423, 5
      %v426 = vsel %vm292, %v421, %v425
      %v427 = vshrl.u32 %v276, 16
      %v429 = vrot.slane %v427, 4
      %v430 = vor.u32 %v429, %v425
      %v431 = vrot.slane %v430, 4
      %v433 = vshll.u32 %v277, 16
      %v435 = vrot.slane %v433, 5
      %v436 = vsel %vm292, %v431, %v435
      %v438 = vshrl.u32 %v278, 16
      %v440 = vrot.slane %v438, 4
      %v441 = vshll.u32 %v278, 16
      %v443 = vrot.slane %v441, 5
      %v444 = vor.u32 %v440, %v443
      %v445 = vrot.slane %v444, 4
      %v447 = vshll.u32 %v279, 16
      %v449 = vrot.slane %v447, 5
      %v450 = vsel %vm292, %v445, %v449
      %v451 = vshrl.u32 %v279, 16
      %v453 = vrot.slane %v451, 4
      %v454 = vor.u32 %v453, %v449
      %v455 = vrot.slane %v454, 4
      %v457 = vshll.u32 %v280, 16
      %v459 = vrot.slane %v457, 5
      %v460 = vsel %vm292, %v455, %v459
      %v462 = vshrl.u32 %v281, 16
      %v464 = vrot.slane %v462, 4
      %v465 = vshll.u32 %v281, 16
      %v467 = vrot.slane %v465, 5
      %v468 = vor.u32 %v464, %v467
      %v469 = vrot.slane %v468, 4
      %v471 = vshll.u32 %v282, 16
      %v473 = vrot.slane %v471, 5
      %v474 = vsel %vm292, %v469, %v473
      %v475 = vshrl.u32 %v282, 16
      %v477 = vrot.slane %v475, 4
      %v478 = vor.u32 %v477, %v473
      %v479 = vrot.slane %v478, 4
      %v481 = vshll.u32 %v283, 16
      %v483 = vrot.slane %v481, 5
      %v484 = vsel %vm292, %v479, %v483
      %vm509 = vcmask 1042432
      %vm510 = vcmask 1046532
      %vm511 = vmor %vm509, %vm510
      %v512 = vrot.slane %v260, 5
      %v513 = vrot.slane %v512, 4
      %v514 = vrot.slane %v261, 5
      %v515 = vsel %vm511, %v513, %v514
      %v516 = vrot.slane %v514, 4
      %v517 = vrot.slane %v262, 5
      %v518 = vsel %vm511, %v516, %v517
      %v519 = vrot.slane %v263, 5
      %v520 = vrot.slane %v519, 4
      %v521 = vrot.slane %v264, 5
      %v522 = vsel %vm511, %v520, %v521
      %v523 = vrot.slane %v521, 4
      %v524 = vrot.slane %v265, 5
      %v525 = vsel %vm511, %v523, %v524
      %v526 = vrot.slane %v266, 5
      %v527 = vrot.slane %v526, 4
      %v528 = vrot.slane %v267, 5
      %v529 = vsel %vm511, %v527, %v528
      %v530 = vrot.slane %v528, 4
      %v531 = vrot.slane %v268, 5
      %v532 = vsel %vm511, %v530, %v531
      %v533 = vrot.slane %v269, 5
      %v534 = vrot.slane %v533, 4
      %v535 = vrot.slane %v270, 5
      %v536 = vsel %vm511, %v534, %v535
      %v537 = vrot.slane %v535, 4
      %v538 = vrot.slane %v271, 5
      %v539 = vsel %vm511, %v537, %v538
      %v540 = vrot.slane %v272, 5
      %v541 = vrot.slane %v540, 4
      %v542 = vrot.slane %v273, 5
      %v543 = vsel %vm511, %v541, %v542
      %v544 = vrot.slane %v542, 4
      %v545 = vrot.slane %v274, 5
      %v546 = vsel %vm511, %v544, %v545
      %v547 = vrot.slane %v275, 5
      %v548 = vrot.slane %v547, 4
      %v549 = vrot.slane %v276, 5
      %v550 = vsel %vm511, %v548, %v549
      %v551 = vrot.slane %v549, 4
      %v552 = vrot.slane %v277, 5
      %v553 = vsel %vm511, %v551, %v552
      %v554 = vrot.slane %v278, 5
      %v555 = vrot.slane %v554, 4
      %v556 = vrot.slane %v279, 5
      %v557 = vsel %vm511, %v555, %v556
      %v558 = vrot.slane %v556, 4
      %v559 = vrot.slane %v280, 5
      %v560 = vsel %vm511, %v558, %v559
      %v561 = vrot.slane %v281, 5
      %v562 = vrot.slane %v561, 4
      %v563 = vrot.slane %v282, 5
      %v564 = vsel %vm511, %v562, %v563
      %v565 = vrot.slane %v563, 4
      %v566 = vrot.slane %v283, 5
      %v567 = vsel %vm511, %v565, %v566
      %v569 = vshrl.u32 %v284, 16
      %v571 = vrot.slane %v569, 4
      %v572 = vshll.u32 %v284, 16
      %v574 = vrot.slane %v572, 5
      %v575 = vor.u32 %v571, %v574
      %v576 = vrot.slane %v575, 4
      %v578 = vshll.u32 %v285, 16
      %v580 = vrot.slane %v578, 5
      %v581 = vsel %vm292, %v576, %v580
      %v582 = vshrl.u32 %v285, 16
      %v584 = vrot.slane %v582, 4
      %v585 = vor.u32 %v584, %v580
      %v586 = vrot.slane %v585, 4
      %v588 = vshll.u32 %v286, 16
      %v590 = vrot.slane %v588, 5
      %v591 = vsel %vm292, %v586, %v590
      %v595 = vrot.slane %v284, 5
      %v596 = vrot.slane %v595, 4
      %v597 = vrot.slane %v285, 5
      %v598 = vsel %vm511, %v596, %v597
      %v599 = vrot.slane %v597, 4
      %v600 = vrot.slane %v286, 5
      %v601 = vsel %vm511, %v599, %v600
      %v603 = vshrl.u32 %v287, 16
      %v605 = vrot.slane %v603, 4
      %v606 = vshll.u32 %v287, 16
      %v608 = vrot.slane %v606, 5
      %v609 = vor.u32 %v605, %v608
      %v610 = vrot.slane %v609, 4
      %v612 = vshll.u32 %v288, 16
      %v614 = vrot.slane %v612, 5
      %v615 = vsel %vm292, %v610, %v614
      %v616 = vshrl.u32 %v288, 16
      %v618 = vrot.slane %v616, 4
      %v619 = vor.u32 %v618, %v614
      %v620 = vrot.slane %v619, 4
      %v622 = vshll.u32 %v289, 16
      %v624 = vrot.slane %v622, 5
      %v625 = vsel %vm292, %v620, %v624
      %v629 = vrot.slane %v287, 5
      %v630 = vrot.slane %v629, 4
      %v631 = vrot.slane %v288, 5
      %v632 = vsel %vm511, %v630, %v631
      %v633 = vrot.slane %v631, 4
      %v634 = vrot.slane %v289, 5
      %v635 = vsel %vm511, %v633, %v634
      %v636 = vunpack.c.l.b16 %v260
      %v637 = vunpack.c.l.b16 %v261
      %v638 = vunpack.c.l.b16 %v263
      %v639 = vunpack.c.l.b16 %v264
      %v640 = vunpack.c.l.b16 %v266
      %v641 = vunpack.c.l.b16 %v267
      %v642 = vunpack.c.l.b16 %v269
      %v643 = vunpack.c.l.b16 %v270
      %v644 = vunpack.c.l.b16 %v272
      %v645 = vunpack.c.l.b16 %v273
      %v646 = vunpack.c.l.b16 %v275
      %v647 = vunpack.c.l.b16 %v276
      %v648 = vunpack.c.l.b16 %v278
      %v649 = vunpack.c.l.b16 %v279
      %v650 = vunpack.c.l.b16 %v281
      %v651 = vunpack.c.l.b16 %v282
      %v652 = vpack.c.b16 %v637, %v636
      %v653 = vpack.c.b16 %v639, %v638
      %v654 = vpack.c.b16 %v641, %v640
      %v655 = vpack.c.b16 %v643, %v642
      %v656 = vpack.c.b16 %v645, %v644
      %v657 = vpack.c.b16 %v647, %v646
      %v658 = vpack.c.b16 %v649, %v648
      %v659 = vpack.c.b16 %v651, %v650
      %v660 = vunpack.c.l.b16 %v306
      %v661 = vunpack.c.l.b16 %v316
      %v662 = vunpack.c.l.b16 %v330
      %v663 = vunpack.c.l.b16 %v340
      %v664 = vunpack.c.l.b16 %v354
      %v665 = vunpack.c.l.b16 %v364
      %v666 = vunpack.c.l.b16 %v378
      %v667 = vunpack.c.l.b16 %v388
      %v668 = vunpack.c.l.b16 %v402
      %v669 = vunpack.c.l.b16 %v412
      %v670 = vunpack.c.l.b16 %v426
      %v671 = vunpack.c.l.b16 %v436
      %v672 = vunpack.c.l.b16 %v450
      %v673 = vunpack.c.l.b16 %v460
      %v674 = vunpack.c.l.b16 %v474
      %v675 = vunpack.c.l.b16 %v484
      %v676 = vpack.c.b16 %v661, %v660
      %v677 = vpack.c.b16 %v663, %v662
      %v678 = vpack.c.b16 %v665, %v664
      %v679 = vpack.c.b16 %v667, %v666
      %v680 = vpack.c.b16 %v669, %v668
      %v681 = vpack.c.b16 %v671, %v670
      %v682 = vpack.c.b16 %v673, %v672
      %v683 = vpack.c.b16 %v675, %v674
      %684 = vrot.lane.b32.xlu0 %v676, 32
      %v685 = vpop.permute.xlu0 %684
      %686 = vrot.lane.b32.xlu0 %v677, 32
      %v687 = vpop.permute.xlu0 %686
      %688 = vrot.lane.b32.xlu0 %v678, 32
      %v689 = vpop.permute.xlu0 %688
      %690 = vrot.lane.b32.xlu0 %v679, 32
      %v691 = vpop.permute.xlu0 %690
      %692 = vrot.lane.b32.xlu0 %v680, 32
      %v693 = vpop.permute.xlu0 %692
      %694 = vrot.lane.b32.xlu0 %v681, 32
      %v695 = vpop.permute.xlu0 %694
      %696 = vrot.lane.b32.xlu0 %v682, 32
      %v697 = vpop.permute.xlu0 %696
      %698 = vrot.lane.b32.xlu0 %v683, 32
      %v699 = vpop.permute.xlu0 %698
      %v700 = vunpack.c.l.b16 %v515
      %v701 = vunpack.c.l.b16 %v518
      %v702 = vunpack.c.l.b16 %v522
      %v703 = vunpack.c.l.b16 %v525
      %v704 = vunpack.c.l.b16 %v529
      %v705 = vunpack.c.l.b16 %v532
      %v706 = vunpack.c.l.b16 %v536
      %v707 = vunpack.c.l.b16 %v539
      %v708 = vunpack.c.l.b16 %v543
      %v709 = vunpack.c.l.b16 %v546
      %v710 = vunpack.c.l.b16 %v550
      %v711 = vunpack.c.l.b16 %v553
      %v712 = vunpack.c.l.b16 %v557
      %v713 = vunpack.c.l.b16 %v560
      %v714 = vunpack.c.l.b16 %v564
      %v715 = vunpack.c.l.b16 %v567
      %v716 = vpack.c.b16 %v701, %v700
      %v717 = vpack.c.b16 %v703, %v702
      %v718 = vpack.c.b16 %v705, %v704
      %v719 = vpack.c.b16 %v707, %v706
      %v720 = vpack.c.b16 %v709, %v708
      %v721 = vpack.c.b16 %v711, %v710
      %v722 = vpack.c.b16 %v713, %v712
      %v723 = vpack.c.b16 %v715, %v714
      %724 = vrot.lane.b32.xlu0 %v716, 64
      %v725 = vpop.permute.xlu0 %724
      %726 = vrot.lane.b32.xlu0 %v717, 64
      %v727 = vpop.permute.xlu0 %726
      %728 = vrot.lane.b32.xlu0 %v718, 64
      %v729 = vpop.permute.xlu0 %728
      %730 = vrot.lane.b32.xlu0 %v719, 64
      %v731 = vpop.permute.xlu0 %730
      %732 = vrot.lane.b32.xlu0 %v720, 64
      %v733 = vpop.permute.xlu0 %732
      %734 = vrot.lane.b32.xlu0 %v721, 64
      %v735 = vpop.permute.xlu0 %734
      %736 = vrot.lane.b32.xlu0 %v722, 64
      %v737 = vpop.permute.xlu0 %736
      %738 = vrot.lane.b32.xlu0 %v723, 64
      %v739 = vpop.permute.xlu0 %738
      %v740 = vunpack.c.l.b16 %v284
      %v741 = vunpack.c.l.b16 %v285
      %v742 = vpack.c.b16 %v741, %v740
      %743 = vrot.lane.b32.xlu0 %v653, 96
      %v744 = vpop.permute.xlu0 %743
      %745 = vrot.lane.b32.xlu0 %v654, 96
      %v746 = vpop.permute.xlu0 %745
      %747 = vrot.lane.b32.xlu0 %v655, 96
      %v748 = vpop.permute.xlu0 %747
      %749 = vrot.lane.b32.xlu0 %v656, 96
      %v750 = vpop.permute.xlu0 %749
      %751 = vrot.lane.b32.xlu0 %v657, 96
      %v752 = vpop.permute.xlu0 %751
      %753 = vrot.lane.b32.xlu0 %v658, 96
      %v754 = vpop.permute.xlu0 %753
      %755 = vrot.lane.b32.xlu0 %v659, 96
      %v756 = vpop.permute.xlu0 %755
      %757 = vrot.lane.b32.xlu0 %v742, 96
      %v758 = vpop.permute.xlu0 %757
      %v759 = vunpack.c.l.b16 %v581
      %v760 = vunpack.c.l.b16 %v591
      %v761 = vpack.c.b16 %v760, %v759
      %v762 = vunpack.c.l.b16 %v598
      %v763 = vunpack.c.l.b16 %v601
      %v764 = vpack.c.b16 %v763, %v762
      %765 = vrot.lane.b32.xlu0 %v717, 32
      %v766 = vpop.permute.xlu0 %765
      %767 = vrot.lane.b32.xlu0 %v718, 32
      %v768 = vpop.permute.xlu0 %767
      %769 = vrot.lane.b32.xlu0 %v719, 32
      %v770 = vpop.permute.xlu0 %769
      %771 = vrot.lane.b32.xlu0 %v720, 32
      %v772 = vpop.permute.xlu0 %771
      %773 = vrot.lane.b32.xlu0 %v721, 32
      %v774 = vpop.permute.xlu0 %773
      %775 = vrot.lane.b32.xlu0 %v722, 32
      %v776 = vpop.permute.xlu0 %775
      %777 = vrot.lane.b32.xlu0 %v723, 32
      %v778 = vpop.permute.xlu0 %777
      %779 = vrot.lane.b32.xlu0 %v764, 32
      %v780 = vpop.permute.xlu0 %779
      %v781 = vunpack.c.l.b16 %v287
      %v782 = vunpack.c.l.b16 %v288
      %v783 = vpack.c.b16 %v782, %v781
      %784 = vrot.lane.b32.xlu0 %v654, 64
      %v785 = vpop.permute.xlu0 %784
      %786 = vrot.lane.b32.xlu0 %v655, 64
      %v787 = vpop.permute.xlu0 %786
      %788 = vrot.lane.b32.xlu0 %v656, 64
      %v789 = vpop.permute.xlu0 %788
      %790 = vrot.lane.b32.xlu0 %v657, 64
      %v791 = vpop.permute.xlu0 %790
      %792 = vrot.lane.b32.xlu0 %v658, 64
      %v793 = vpop.permute.xlu0 %792
      %794 = vrot.lane.b32.xlu0 %v659, 64
      %v795 = vpop.permute.xlu0 %794
      %796 = vrot.lane.b32.xlu0 %v742, 64
      %v797 = vpop.permute.xlu0 %796
      %798 = vrot.lane.b32.xlu0 %v783, 64
      %v799 = vpop.permute.xlu0 %798
      %v800 = vunpack.c.l.b16 %v615
      %v801 = vunpack.c.l.b16 %v625
      %v802 = vpack.c.b16 %v801, %v800
      %803 = vrot.lane.b32.xlu0 %v678, 96
      %v804 = vpop.permute.xlu0 %803
      %805 = vrot.lane.b32.xlu0 %v679, 96
      %v806 = vpop.permute.xlu0 %805
      %807 = vrot.lane.b32.xlu0 %v680, 96
      %v808 = vpop.permute.xlu0 %807
      %809 = vrot.lane.b32.xlu0 %v681, 96
      %v810 = vpop.permute.xlu0 %809
      %811 = vrot.lane.b32.xlu0 %v682, 96
      %v812 = vpop.permute.xlu0 %811
      %813 = vrot.lane.b32.xlu0 %v683, 96
      %v814 = vpop.permute.xlu0 %813
      %815 = vrot.lane.b32.xlu0 %v761, 96
      %v816 = vpop.permute.xlu0 %815
      %817 = vrot.lane.b32.xlu0 %v802, 96
      %v818 = vpop.permute.xlu0 %817
      %v819 = vunpack.c.l.b16 %v632
      %v820 = vunpack.c.l.b16 %v635
      %v821 = vpack.c.b16 %v820, %v819
      %vm822 = vcmask 261120
      %v825 = vsel %vm822, %v652, %v685
      %v828 = vsel %vm822, %v653, %v687
      %v831 = vsel %vm822, %v654, %v689
      %v834 = vsel %vm822, %v655, %v691
      %v837 = vsel %vm822, %v656, %v693
      %v840 = vsel %vm822, %v657, %v695
      %v843 = vsel %vm822, %v658, %v697
      %v846 = vsel %vm822, %v659, %v699
      %vm847 = vcmask 523264
      %v849 = vsel %vm847, %v825, %v725
      %v851 = vsel %vm847, %v828, %v727
      %v853 = vsel %vm847, %v831, %v729
      %v855 = vsel %vm847, %v834, %v731
      %v857 = vsel %vm847, %v837, %v733
      %v859 = vsel %vm847, %v840, %v735
      %v861 = vsel %vm847, %v843, %v737
      %v863 = vsel %vm847, %v846, %v739
      %vm864 = vcmask 785408
      %v866 = vsel %vm864, %v849, %v744
      %v869 = vsel %vm864, %v851, %v746
      %v872 = vsel %vm864, %v853, %v748
      %v875 = vsel %vm864, %v855, %v750
      %v878 = vsel %vm864, %v857, %v752
      %v881 = vsel %vm864, %v859, %v754
      %v884 = vsel %vm864, %v861, %v756
      %v887 = vsel %vm864, %v863, %v758
      %v891 = vsel %vm822, %v677, %v766
      %v894 = vsel %vm822, %v678, %v768
      %v897 = vsel %vm822, %v679, %v770
      %v900 = vsel %vm822, %v680, %v772
      %v903 = vsel %vm822, %v681, %v774
      %v906 = vsel %vm822, %v682, %v776
      %v909 = vsel %vm822, %v683, %v778
      %v912 = vsel %vm822, %v761, %v780
      %v914 = vsel %vm847, %v891, %v785
      %v916 = vsel %vm847, %v894, %v787
      %v918 = vsel %vm847, %v897, %v789
      %v920 = vsel %vm847, %v900, %v791
      %v922 = vsel %vm847, %v903, %v793
      %v924 = vsel %vm847, %v906, %v795
      %v926 = vsel %vm847, %v909, %v797
      %v928 = vsel %vm847, %v912, %v799
      %v930 = vsel %vm864, %v914, %v804
      %v933 = vsel %vm864, %v916, %v806
      %v936 = vsel %vm864, %v918, %v808
      %v939 = vsel %vm864, %v920, %v810
      %v942 = vsel %vm864, %v922, %v812
      %v945 = vsel %vm864, %v924, %v814
      %v948 = vsel %vm864, %v926, %v816
      %v951 = vsel %vm864, %v928, %v818
      %v953 = vld [vmem:[%s1] sm:$0xf]
      %v954 = vld [vmem:[%s1 + $0x4] sm:$0xf]
      %v955 = vld [vmem:[%s1 + $0x8] sm:$0xf]
      %v956 = vld [vmem:[%s1 + $0xc] sm:$0xf]
      %v957 = vld [vmem:[%s1 + $0x10] sm:$0xf]
      %v958 = vld [vmem:[%s1 + $0x14] sm:$0xf]
      %v959 = vld [vmem:[%s1 + $0x18] sm:$0xf]
      %v960 = vld [vmem:[%s1 + $0x1c] sm:$0xf]
      %v961 = vld [vmem:[%s1 + $0x20] sm:$0xf]
      %v962 = vld [vmem:[%s1 + $0x24] sm:$0xf]
      %v963 = vld [vmem:[%s1 + $0x28] sm:$0xf]
      %v964 = vld [vmem:[%s1 + $0x2c] sm:$0xf]
      %v965 = vld [vmem:[%s1 + $0x30] sm:$0xf]
      %v966 = vld [vmem:[%s1 + $0x34] sm:$0xf]
      %v967 = vld [vmem:[%s1 + $0x38] sm:$0xf]
      %v968 = vld [vmem:[%s1 + $0x3c] sm:$0xf]
      %v969 = vld [vmem:[%s1 + $0x40] sm:$0xf]
      %v970 = vld [vmem:[%s1 + $0x44] sm:$0xf]
      %v971 = vld [vmem:[%s1 + $0x48] sm:$0xf]
      %v972 = vld [vmem:[%s1 + $0x4c] sm:$0xf]
      %v973 = vld [vmem:[%s1 + $0x50] sm:$0xf]
      %v974 = vld [vmem:[%s1 + $0x54] sm:$0xf]
      %v975 = vld [vmem:[%s1 + $0x58] sm:$0xf]
      %v976 = vld [vmem:[%s1 + $0x5c] sm:$0xf]
      %v977 = vld [vmem:[%s1 + $0x60] sm:$0xf]
      %v978 = vld [vmem:[%s1 + $0x64] sm:$0xf]
      %v979 = vld [vmem:[%s1 + $0x68] sm:$0xf]
      %v980 = vld [vmem:[%s1 + $0x6c] sm:$0xf]
      %v981 = vld [vmem:[%s1 + $0x70] sm:$0xf]
      %v982 = vld [vmem:[%s1 + $0x74] sm:$0xf]
      %v983 = vld [vmem:[%s1 + $0x78] sm:$0xf]
      %v984 = vld [vmem:[%s1 + $0x7c] sm:$0xf]
      %v985 = vld [vmem:[%s1 + $0x80] sm:$0xf]
      %v986 = vld [vmem:[%s1 + $0x84] sm:$0xf]
      %v987 = vld [vmem:[%s1 + $0x88] sm:$0xf]
      %v988 = vld [vmem:[%s1 + $0x8c] sm:$0xf]
      %v989 = vld [vmem:[%s2] sm:$0x1]
      %v991 = vperm.slane %v989, 0
      %v1029 = vunpack.c.l.b16 %v953
      %v1030 = vunpack.c.l.b16 %v954
      %v1031 = vunpack.c.l.b16 %v955
      %v1032 = vunpack.c.l.b16 %v956
      %v1033 = vunpack.c.l.b16 %v957
      %v1034 = vunpack.c.l.b16 %v958
      %v1035 = vunpack.c.l.b16 %v959
      %v1036 = vunpack.c.l.b16 %v960
      %v1037 = vunpack.c.l.b16 %v961
      %v1038 = vunpack.c.l.b16 %v962
      %v1039 = vunpack.c.l.b16 %v963
      %v1040 = vunpack.c.l.b16 %v964
      %v1041 = vunpack.c.l.b16 %v965
      %v1042 = vunpack.c.l.b16 %v966
      %v1043 = vunpack.c.l.b16 %v967
      %v1044 = vunpack.c.l.b16 %v968
      %v1045 = vunpack.c.l.b16 %v969
      %v1046 = vunpack.c.l.b16 %v970
      %v1047 = vunpack.c.l.b16 %v971
      %v1048 = vunpack.c.l.b16 %v972
      %v1049 = vunpack.c.l.b16 %v973
      %v1050 = vunpack.c.l.b16 %v974
      %v1051 = vunpack.c.l.b16 %v975
      %v1052 = vunpack.c.l.b16 %v976
      %v1053 = vunpack.c.l.b16 %v977
      %v1054 = vunpack.c.l.b16 %v978
      %v1055 = vunpack.c.l.b16 %v979
      %v1056 = vunpack.c.l.b16 %v980
      %v1057 = vunpack.c.l.b16 %v981
      %v1058 = vunpack.c.l.b16 %v982
      %v1059 = vunpack.c.l.b16 %v983
      %v1060 = vunpack.c.l.b16 %v984
      %v1061 = vunpack.c.l.b16 %v985
      %v1062 = vunpack.c.l.b16 %v986
      %v1063 = vunpack.c.l.b16 %v987
      %v1064 = vunpack.c.l.b16 %v988
      %v1065 = vpack.c.b16 %v1030, %v1029
      %v1066 = vpack.c.b16 %v1032, %v1031
      %v1067 = vpack.c.b16 %v1034, %v1033
      %v1068 = vpack.c.b16 %v1036, %v1035
      %v1069 = vpack.c.b16 %v1038, %v1037
      %v1070 = vpack.c.b16 %v1040, %v1039
      %v1071 = vpack.c.b16 %v1042, %v1041
      %v1072 = vpack.c.b16 %v1044, %v1043
      %v1073 = vpack.c.b16 %v1046, %v1045
      %v1074 = vpack.c.b16 %v1048, %v1047
      %v1075 = vpack.c.b16 %v1050, %v1049
      %v1076 = vpack.c.b16 %v1052, %v1051
      %v1077 = vpack.c.b16 %v1054, %v1053
      %v1078 = vpack.c.b16 %v1056, %v1055
      %v1079 = vpack.c.b16 %v1058, %v1057
      %v1080 = vpack.c.b16 %v1060, %v1059
      %v1081 = vpack.c.b16 %v1062, %v1061
      %v1082 = vpack.c.b16 %v1064, %v1063
      %v1102 = vsel %vm822, %v718, 0
      %v1105 = vsel %vm822, %v719, 0
      %v1108 = vsel %vm822, %v720, 0
      %v1111 = vsel %vm822, %v721, 0
      %v1114 = vsel %vm822, %v722, 0
      %v1117 = vsel %vm822, %v723, 0
      %v1120 = vsel %vm822, %v764, 0
      %v1123 = vsel %vm822, %v821, 0
      %1125 = vmatpush.bf16.msra.mxu0 %v1072
      %1126 = vmatpush.bf16.msra.mxu0 %v1071
      %1127 = vmatpush.bf16.msra.mxu0 %v1070
      %1128 = vmatpush.bf16.msra.mxu0 %v1069
      %1129 = vmatpush.bf16.msra.mxu0 %v1068
      %1130 = vmatpush.bf16.msra.mxu0 %v1067
      %1131 = vmatpush.bf16.msra.mxu0 %v1066
      %1132 = vmatpush.bf16.msra.mxu0 %v1065
      %1133 = vmatmul.bf16.gmra.mxu0 %v866
      %v1134 = vpop.f32.mrf.mxu0
      %v1135 = vadd.f32 %v991, %v1134
      %v1136 = vpop.f32.mrf.mxu0
      %v1137 = vadd.f32 %v991, %v1136
      %1138 = vmatmul.bf16.gmra.mxu0 %v869
      %v1139 = vpop.f32.mrf.mxu0
      %v1140 = vadd.f32 %v991, %v1139
      %v1141 = vpop.f32.mrf.mxu0
      %v1142 = vadd.f32 %v991, %v1141
      %1143 = vmatmul.bf16.gmra.mxu0 %v872
      %v1144 = vpop.f32.mrf.mxu0
      %v1145 = vadd.f32 %v991, %v1144
      %v1146 = vpop.f32.mrf.mxu0
      %v1147 = vadd.f32 %v991, %v1146
      %1148 = vmatmul.bf16.gmra.mxu0 %v875
      %v1149 = vpop.f32.mrf.mxu0
      %v1150 = vadd.f32 %v991, %v1149
      %v1151 = vpop.f32.mrf.mxu0
      %v1152 = vadd.f32 %v991, %v1151
      %1153 = vmatmul.bf16.gmra.mxu0 %v878
      %v1154 = vpop.f32.mrf.mxu0
      %v1155 = vadd.f32 %v991, %v1154
      %v1156 = vpop.f32.mrf.mxu0
      %v1157 = vadd.f32 %v991, %v1156
      %1158 = vmatmul.bf16.gmra.mxu0 %v881
      %v1159 = vpop.f32.mrf.mxu0
      %v1160 = vadd.f32 %v991, %v1159
      %v1161 = vpop.f32.mrf.mxu0
      %v1162 = vadd.f32 %v991, %v1161
      %1163 = vmatmul.bf16.gmra.mxu0 %v884
      %v1164 = vpop.f32.mrf.mxu0
      %v1165 = vadd.f32 %v991, %v1164
      %v1166 = vpop.f32.mrf.mxu0
      %v1167 = vadd.f32 %v991, %v1166
      %1168 = vmatmul.bf16.gmra.mxu0 %v887
      %v1169 = vpop.f32.mrf.mxu0
      %v1170 = vadd.f32 %v991, %v1169
      %v1171 = vpop.f32.mrf.mxu0
      %v1172 = vadd.f32 %v991, %v1171
      %1173 = vdwg.mxu0
      %1174 = vmatpush.bf16.msra.mxu0 %v1080
      %1175 = vmatpush.bf16.msra.mxu0 %v1079
      %1176 = vmatpush.bf16.msra.mxu0 %v1078
      %1177 = vmatpush.bf16.msra.mxu0 %v1077
      %1178 = vmatpush.bf16.msra.mxu0 %v1076
      %1179 = vmatpush.bf16.msra.mxu0 %v1075
      %1180 = vmatpush.bf16.msra.mxu0 %v1074
      %1181 = vmatpush.bf16.msra.mxu0 %v1073
      %1182 = vmatmul.bf16.gmra.mxu0 %v930
      %v1183 = vpop.f32.mrf.mxu0
      %v1184 = vadd.f32 %v1135, %v1183
      %v1185 = vpop.f32.mrf.mxu0
      %v1186 = vadd.f32 %v1137, %v1185
      %1187 = vmatmul.bf16.gmra.mxu0 %v933
      %v1188 = vpop.f32.mrf.mxu0
      %v1189 = vadd.f32 %v1140, %v1188
      %v1190 = vpop.f32.mrf.mxu0
      %v1191 = vadd.f32 %v1142, %v1190
      %1192 = vmatmul.bf16.gmra.mxu0 %v936
      %v1193 = vpop.f32.mrf.mxu0
      %v1194 = vadd.f32 %v1145, %v1193
      %v1195 = vpop.f32.mrf.mxu0
      %v1196 = vadd.f32 %v1147, %v1195
      %1197 = vmatmul.bf16.gmra.mxu0 %v939
      %v1198 = vpop.f32.mrf.mxu0
      %v1199 = vadd.f32 %v1150, %v1198
      %v1200 = vpop.f32.mrf.mxu0
      %v1201 = vadd.f32 %v1152, %v1200
      %1202 = vmatmul.bf16.gmra.mxu0 %v942
      %v1203 = vpop.f32.mrf.mxu0
      %v1204 = vadd.f32 %v1155, %v1203
      %v1205 = vpop.f32.mrf.mxu0
      %v1206 = vadd.f32 %v1157, %v1205
      %1207 = vmatmul.bf16.gmra.mxu0 %v945
      %v1208 = vpop.f32.mrf.mxu0
      %v1209 = vadd.f32 %v1160, %v1208
      %v1210 = vpop.f32.mrf.mxu0
      %v1211 = vadd.f32 %v1162, %v1210
      %1212 = vmatmul.bf16.gmra.mxu0 %v948
      %v1213 = vpop.f32.mrf.mxu0
      %v1214 = vadd.f32 %v1165, %v1213
      %v1215 = vpop.f32.mrf.mxu0
      %v1216 = vadd.f32 %v1167, %v1215
      %1217 = vmatmul.bf16.gmra.mxu0 %v951
      %v1218 = vpop.f32.mrf.mxu0
      %v1219 = vadd.f32 %v1170, %v1218
      %v1220 = vpop.f32.mrf.mxu0
      %v1221 = vadd.f32 %v1172, %v1220
      %1222 = vdwg.mxu0
      %1223 = vmatpush.bf16.msra.mxu0 0
      %1224 = vmatpush.bf16.msra.mxu0 0
      %1225 = vmatpush.bf16.msra.mxu0 0
      %1226 = vmatpush.bf16.msra.mxu0 0
      %1227 = vmatpush.bf16.msra.mxu0 0
      %1228 = vmatpush.bf16.msra.mxu0 0
      %1229 = vmatpush.bf16.msra.mxu0 %v1082
      %1230 = vmatpush.bf16.msra.mxu0 %v1081
      %1231 = vmatmul.bf16.gmra.mxu0 %v1102
      %v1232 = vpop.f32.mrf.mxu0
      %v1233 = vadd.f32 %v1184, %v1232
      %v1234 = vpop.f32.mrf.mxu0
      %v1235 = vadd.f32 %v1186, %v1234
      %1236 = vmatmul.bf16.gmra.mxu0 %v1105
      %v1237 = vpop.f32.mrf.mxu0
      %v1238 = vadd.f32 %v1189, %v1237
      %v1239 = vpop.f32.mrf.mxu0
      %v1240 = vadd.f32 %v1191, %v1239
      %1241 = vmatmul.bf16.gmra.mxu0 %v1108
      %v1242 = vpop.f32.mrf.mxu0
      %v1243 = vadd.f32 %v1194, %v1242
      %v1244 = vpop.f32.mrf.mxu0
      %v1245 = vadd.f32 %v1196, %v1244
      %1246 = vmatmul.bf16.gmra.mxu0 %v1111
      %v1247 = vpop.f32.mrf.mxu0
      %v1248 = vadd.f32 %v1199, %v1247
      %v1249 = vpop.f32.mrf.mxu0
      %v1250 = vadd.f32 %v1201, %v1249
      %1251 = vmatmul.bf16.gmra.mxu0 %v1114
      %v1252 = vpop.f32.mrf.mxu0
      %v1253 = vadd.f32 %v1204, %v1252
      %v1254 = vpop.f32.mrf.mxu0
      %v1255 = vadd.f32 %v1206, %v1254
      %1256 = vmatmul.bf16.gmra.mxu0 %v1117
      %v1257 = vpop.f32.mrf.mxu0
      %v1258 = vadd.f32 %v1209, %v1257
      %v1259 = vpop.f32.mrf.mxu0
      %v1260 = vadd.f32 %v1211, %v1259
      %1261 = vmatmul.bf16.gmra.mxu0 %v1120
      %v1262 = vpop.f32.mrf.mxu0
      %v1263 = vadd.f32 %v1214, %v1262
      %v1264 = vpop.f32.mrf.mxu0
      %v1265 = vadd.f32 %v1216, %v1264
      %1266 = vmatmul.bf16.gmra.mxu0 %v1123
      %v1267 = vpop.f32.mrf.mxu0
      %v1268 = vadd.f32 %v1219, %v1267
      %v1269 = vpop.f32.mrf.mxu0
      %v1270 = vadd.f32 %v1221, %v1269
      %1271 = vdwg.mxu0
      %v1272 = vmax.f32 %v1233, 0.0
      %v1273 = vmax.f32 %v1235, 0.0
      %v1274 = vmax.f32 %v1238, 0.0
      %v1275 = vmax.f32 %v1240, 0.0
      %v1276 = vmax.f32 %v1243, 0.0
      %v1277 = vmax.f32 %v1245, 0.0
      %v1278 = vmax.f32 %v1248, 0.0
      %v1279 = vmax.f32 %v1250, 0.0
      %v1280 = vmax.f32 %v1253, 0.0
      %v1281 = vmax.f32 %v1255, 0.0
      %v1282 = vmax.f32 %v1258, 0.0
      %v1283 = vmax.f32 %v1260, 0.0
      %v1284 = vmax.f32 %v1263, 0.0
      %v1285 = vmax.f32 %v1265, 0.0
      %v1286 = vmax.f32 %v1268, 0.0
      %v1287 = vmax.f32 %v1270, 0.0
      %v1288 = vpack.c.bf16 %v1273, %v1272
      %v1289 = vpack.c.bf16 %v1275, %v1274
      %v1290 = vpack.c.bf16 %v1277, %v1276
      %v1291 = vpack.c.bf16 %v1279, %v1278
      %v1292 = vpack.c.bf16 %v1281, %v1280
      %v1293 = vpack.c.bf16 %v1283, %v1282
      %v1294 = vpack.c.bf16 %v1285, %v1284
      %v1295 = vpack.c.bf16 %v1287, %v1286
      %v1296 = vld [vmem:[%s3] sm:$0xf]
      %v1297 = vld [vmem:[%s3 + $0x4] sm:$0xf]
      %v1298 = vld [vmem:[%s3 + $0x8] sm:$0xf]
      %v1299 = vld [vmem:[%s3 + $0xc] sm:$0xf]
      %v1300 = vld [vmem:[%s3 + $0x10] sm:$0xf]
      %v1301 = vld [vmem:[%s3 + $0x14] sm:$0xf]
      %v1302 = vld [vmem:[%s3 + $0x18] sm:$0xf]
      %v1303 = vld [vmem:[%s3 + $0x1c] sm:$0xf]
      %v1304 = vld [vmem:[%s3 + $0x20] sm:$0xf]
      %v1305 = vld [vmem:[%s3 + $0x24] sm:$0xf]
      %v1306 = vld [vmem:[%s3 + $0x28] sm:$0xf]
      %v1307 = vld [vmem:[%s3 + $0x2c] sm:$0xf]
      %v1308 = vld [vmem:[%s3 + $0x30] sm:$0xf]
      %v1309 = vld [vmem:[%s3 + $0x34] sm:$0xf]
      %v1310 = vld [vmem:[%s3 + $0x38] sm:$0xf]
      %v1311 = vld [vmem:[%s3 + $0x3c] sm:$0xf]
      %v1312 = vld [vmem:[%s4] sm:$0x1]
      %v1314 = vperm.slane %v1312, 0
      %v1332 = vunpack.c.l.b16 %v1296
      %v1333 = vunpack.c.l.b16 %v1297
      %v1334 = vunpack.c.l.b16 %v1298
      %v1335 = vunpack.c.l.b16 %v1299
      %v1336 = vunpack.c.l.b16 %v1300
      %v1337 = vunpack.c.l.b16 %v1301
      %v1338 = vunpack.c.l.b16 %v1302
      %v1339 = vunpack.c.l.b16 %v1303
      %v1340 = vunpack.c.l.b16 %v1304
      %v1341 = vunpack.c.l.b16 %v1305
      %v1342 = vunpack.c.l.b16 %v1306
      %v1343 = vunpack.c.l.b16 %v1307
      %v1344 = vunpack.c.l.b16 %v1308
      %v1345 = vunpack.c.l.b16 %v1309
      %v1346 = vunpack.c.l.b16 %v1310
      %v1347 = vunpack.c.l.b16 %v1311
      %v1348 = vpack.c.b16 %v1333, %v1332
      %v1349 = vpack.c.b16 %v1335, %v1334
      %v1350 = vpack.c.b16 %v1337, %v1336
      %v1351 = vpack.c.b16 %v1339, %v1338
      %v1352 = vpack.c.b16 %v1341, %v1340
      %v1353 = vpack.c.b16 %v1343, %v1342
      %v1354 = vpack.c.b16 %v1345, %v1344
      %v1355 = vpack.c.b16 %v1347, %v1346
      %1364 = vmatpush.bf16.msra.mxu0 %v1355
      %1365 = vmatpush.bf16.msra.mxu0 %v1354
      %1366 = vmatpush.bf16.msra.mxu0 %v1353
      %1367 = vmatpush.bf16.msra.mxu0 %v1352
      %1368 = vmatpush.bf16.msra.mxu0 %v1351
      %1369 = vmatpush.bf16.msra.mxu0 %v1350
      %1370 = vmatpush.bf16.msra.mxu0 %v1349
      %1371 = vmatpush.bf16.msra.mxu0 %v1348
      %1372 = vmatmul.bf16.gmra.mxu0 %v1288
      %v1373 = vpop.f32.mrf.mxu0
      %v1374 = vadd.f32 %v1314, %v1373
      %v1375 = vpop.f32.mrf.mxu0
      %v1376 = vadd.f32 %v1314, %v1375
      %1377 = vmatmul.bf16.gmra.mxu0 %v1289
      %v1378 = vpop.f32.mrf.mxu0
      %v1379 = vadd.f32 %v1314, %v1378
      %v1380 = vpop.f32.mrf.mxu0
      %v1381 = vadd.f32 %v1314, %v1380
      %1382 = vmatmul.bf16.gmra.mxu0 %v1290
      %v1383 = vpop.f32.mrf.mxu0
      %v1384 = vadd.f32 %v1314, %v1383
      %v1385 = vpop.f32.mrf.mxu0
      %v1386 = vadd.f32 %v1314, %v1385
      %1387 = vmatmul.bf16.gmra.mxu0 %v1291
      %v1388 = vpop.f32.mrf.mxu0
      %v1389 = vadd.f32 %v1314, %v1388
      %v1390 = vpop.f32.mrf.mxu0
      %v1391 = vadd.f32 %v1314, %v1390
      %1392 = vmatmul.bf16.gmra.mxu0 %v1292
      %v1393 = vpop.f32.mrf.mxu0
      %v1394 = vadd.f32 %v1314, %v1393
      %v1395 = vpop.f32.mrf.mxu0
      %v1396 = vadd.f32 %v1314, %v1395
      %1397 = vmatmul.bf16.gmra.mxu0 %v1293
      %v1398 = vpop.f32.mrf.mxu0
      %v1399 = vadd.f32 %v1314, %v1398
      %v1400 = vpop.f32.mrf.mxu0
      %v1401 = vadd.f32 %v1314, %v1400
      %1402 = vmatmul.bf16.gmra.mxu0 %v1294
      %v1403 = vpop.f32.mrf.mxu0
      %v1404 = vadd.f32 %v1314, %v1403
      %v1405 = vpop.f32.mrf.mxu0
      %v1406 = vadd.f32 %v1314, %v1405
      %1407 = vmatmul.bf16.gmra.mxu0 %v1295
      %v1408 = vpop.f32.mrf.mxu0
      %v1409 = vadd.f32 %v1314, %v1408
      %v1410 = vpop.f32.mrf.mxu0
      %v1411 = vadd.f32 %v1314, %v1410
      %1412 = vdwg.mxu0
      %1413 = vxpose.xlu0.b32.start [1/16] %v1374, 128
      %1414 = vxpose.xlu0.b32.cont [2/16] %v1376, 128
      %1415 = vxpose.xlu0.b32.cont [3/16] %v1379, 128
      %1416 = vxpose.xlu0.b32.cont [4/16] %v1381, 128
      %1417 = vxpose.xlu0.b32.cont [5/16] %v1384, 128
      %1418 = vxpose.xlu0.b32.cont [6/16] %v1386, 128
      %1419 = vxpose.xlu0.b32.cont [7/16] %v1389, 128
      %1420 = vxpose.xlu0.b32.cont [8/16] %v1391, 128
      %1421 = vxpose.xlu0.b32.cont [9/16] %v1394, 128
      %1422 = vxpose.xlu0.b32.cont [10/16] %v1396, 128
      %1423 = vxpose.xlu0.b32.cont [11/16] %v1399, 128
      %1424 = vxpose.xlu0.b32.cont [12/16] %v1401, 128
      %1425 = vxpose.xlu0.b32.cont [13/16] %v1404, 128
      %1426 = vxpose.xlu0.b32.cont [14/16] %v1406, 128
      %1427 = vxpose.xlu0.b32.cont [15/16] %v1409, 128
      %1428 = vxpose.xlu0.b32.end [16/16] %v1411, 128
      %v1429 = vpop.trf.xlu0
      %v1430 = vpop.trf.xlu0
      %v1431 = vpop.trf.xlu0
      %v1432 = vpop.trf.xlu0
      %v1433 = vpop.trf.xlu0
      %v1434 = vpop.trf.xlu0
      %v1435 = vpop.trf.xlu0
      %v1436 = vpop.trf.xlu0
      %v1437 = vpop.trf.xlu0
      %v1438 = vpop.trf.xlu0
      %v1439 = vpop.trf.xlu0
      %v1440 = vpop.trf.xlu0
      %v1441 = vpop.trf.xlu0
      %v1442 = vpop.trf.xlu0
      %v1443 = vpop.trf.xlu0
      %v1444 = vpop.trf.xlu0
      %v1445 = vxor.u32 %v1429, 2147483648
      %v1446 = vmul.f32 %v1445, 1.442695
      %v1447 = vpow.pop %v1446
      %v1448 = vadd.f32 %v1447, 1.0
      %v1449 = vrcp.pop %v1448
      %v1450 = vmul.f32 %v1448, %v1449
      %v1451 = vsub.f32 1.0, %v1450
      %v1452 = vmul.f32 %v1449, %v1451
      %v1453 = vadd.f32 %v1449, %v1452
      %vm1454 = vweird.f32 %v1448
      %vm1455 = vweird.f32 %v1449
      %vm1456 = vmor %vm1454, %vm1455
      %v1457 = vsel %vm1456, %v1449, %v1453
      %v1458 = vand.u32 2147483647, %v1448
      %vm1459 = vcmp.eq.f32.partialorder %v1458, 8.507059e+37
      %v1460 = vand.u32 %v1448, 2147483648
      %v1461 = vor.u32 1.1754944e-38, %v1460
      %v1462 = vsel %vm1459, %v1461, %v1457
      %v1463 = vmul.f32 1.0, %v1462
      %1464 = vst [vmem:[%s258] sm:$0x3] %v1463
      %1465 = vst [vmem:[%s258] sm:$0xfc] %v1429
      %p1466 = scmp.lt.s32.totalorder %s20, 1
      %s1467 = scalar_select %p1466, %s20, 1
      %p1468 = scmp.lt.s32.totalorder %s21, 1
      %s1469 = scalar_select %p1468, %s21, 1
      %s1470 = smul.addr %s1467, 2
      %s1471 = sadd.s32 %s1469, %s1470
      %s1472 = smul.addr %s1471, 8
      %s1473 = scalar_lea.vmem %s5, %s1472
      // Predicated region
      $region41: #{centernet_heads_forward.1} parent=39 // pred_check
        %p1474 = pneg %p162
      $region42: #{centernet_heads_forward.1} parent=39 // pred_check_branch
        %1476 = sbr.rel (%p1474) target = $region44
      $region43: #{centernet_heads_forward.1} parent=39 // pred_region
        _
      $region44: #{centernet_heads_forward.1} parent=39 // pred_fallthru
        _
    $region40: #{centernet_heads_forward.1} parent=5 // pred_fallthru
      _
    %p1477 = scmp.le.s32.totalorder 2, %s11
    // Predicated region
    $region45: #{centernet_heads_forward.1} parent=5 // pred_check
      %p1478 = pneg %p1477
    $region46: #{centernet_heads_forward.1} parent=5 // pred_check_branch
      %1480 = sbr.rel (%p1478) target = $region48
    $region47: #{centernet_heads_forward.1} parent=5 // pred_region
      %s1481 = ssub.s32 %s11, 2
      // Predicated region
      $region49: #{centernet_heads_forward.1} parent=47 // pred_check
        %p1482 = pneg %p168
      $region50: #{centernet_heads_forward.1} parent=47 // pred_check_branch
        %1484 = sbr.rel (%p1482) target = $region52
      $region51: #{centernet_heads_forward.1} parent=47 // pred_region
        %p1485 = scmp.lt.s32.totalorder %s22, 1
        %s1486 = scalar_select %p1485, %s22, 1
        %p1487 = scmp.lt.s32.totalorder %s23, 1
        %s1488 = scalar_select %p1487, %s23, 1
        %s1489 = smul.addr %s1486, 2
        %s1490 = sadd.s32 %s1488, %s1489
        %s1491 = smul.addr %s1490, 8
        %s1492 = scalar_lea.vmem %s5, %s1491
      $region52: #{centernet_heads_forward.1} parent=47 // pred_fallthru
        _
    $region48: #{centernet_heads_forward.1} parent=5 // pred_fallthru
      _
  $region6: #{centernet_heads_forward.1} parent=0 // loop_footer
    %s15 = sadd.s32 1, %s11
  $region7: #{centernet_heads_forward.1} parent=0 // loop_footer_branch
    %10 = sbr.rel target = $region3
  $region8: #{centernet_heads_forward.1} parent=0 // loop_exit
    _

</llo_original>
